<compile_context>
chip_gen: v6e
topology: v6e:2x2x1
jax: 0.10.0
libtpu: 0.0.40
codegen_flags: <defaults>
</compile_context>

<pallas_src>
import math
from functools import partial

import jax
import jax.numpy as jnp
from jax.experimental import pallas as pl
from jax.experimental.pallas import tpu as pltpu


def _fourier_features_kernel(x_ref, w2_ref, b_ref, o_ref):
    # x_ref : [TB, IN]
    # w2_ref: [IN, OUT]   (= tau * [W.T | W.T], pre-built in the wrapper)
    # b_ref : [1,  OUT]   (= [0 ... 0 | -pi/2 ... -pi/2])
    # o_ref : [TB, OUT]
    f = jnp.dot(x_ref[...], w2_ref[...], preferred_element_type=jnp.float32)
    f = f + b_ref[...]                      # broadcast bias row over the tile
    # One fused elementwise chain, one full-width lane-dense (unmasked) store.
    o_ref[...] = jnp.cos(f).astype(o_ref.dtype)


def _round_up(x, m):
    return ((x + m - 1) // m) * m


def _choose_block_rows(B, out_features, itemsize,
                       target_out_bytes=2 << 20, max_rows=2048):
    """Pick batch tile rows: ~target_out_bytes of output per grid step,
    >= 2 grid steps once B >= 16 (v7x megacore), multiple of 8."""
    tb = max(8, target_out_bytes // max(1, out_features * itemsize))
    tb = min(tb, max_rows)
    if B >= 16:
        # Guarantee at least 2 grid steps so the "parallel" axis can shard
        # across v7x's 2 TensorCores.
        tb = min(tb, _round_up(pl.cdiv(B, 2), 8))
    tb = max(8, (tb // 8) * 8)
    if tb >= B:
        return B          # single full block (block == array dim is legal)
    return tb


def fourier_features(x, weight):
    """x: [..., in_features], weight: [out_features//2, in_features]
    -> [..., out_features]."""
    *lead, in_features = x.shape
    half, in_w = weight.shape
    assert in_w == in_features
    out_features = 2 * half

    x2d = x.reshape(-1, in_features)
    B = x2d.shape[0]

    # Fold tau + transpose into the parameter once; duplicate the columns so
    # both halves come from one matmul, and shift the sin half by -pi/2 via a
    # bias row: cat([cos(f), sin(f)]) == cos([f | f] + [0 | -pi/2]).
    w_t = ((2.0 * math.pi) * weight.astype(jnp.float32)).T        # [IN, HALF]
    w2 = jnp.concatenate([w_t, w_t], axis=1).astype(weight.dtype)  # [IN, OUT]
    bias = jnp.concatenate(
        [jnp.zeros((1, half), jnp.float32),
         jnp.full((1, half), -0.5 * math.pi, jnp.float32)], axis=1)  # [1, OUT]

    itemsize = jnp.dtype(x.dtype).itemsize
    tb = _choose_block_rows(B, out_features, itemsize)
    nb = pl.cdiv(B, tb)

    cost = pl.CostEstimate(
        flops=2 * B * out_features * in_features,
        transcendentals=B * out_features,             # one cos per output elem
        bytes_accessed=(B * in_features * itemsize
                        + in_features * out_features * jnp.dtype(w2.dtype).itemsize
                        + out_features * 4
                        + B * out_features * itemsize),
    )

    out2d = pl.pallas_call(
        _fourier_features_kernel,
        out_shape=jax.ShapeDtypeStruct((B, out_features), x.dtype),
        grid_spec=pltpu.PrefetchScalarGridSpec(
            num_scalar_prefetch=0,
            grid=(nb,),
            in_specs=[
                # Batch-tiled activations: double-buffered across grid steps.
                pl.BlockSpec((tb, in_features), lambda i: (i, 0)),
                # Constant index_maps -> weight/bias stay resident in VMEM.
                pl.BlockSpec((in_features, out_features), lambda i: (0, 0)),
                pl.BlockSpec((1, out_features), lambda i: (0, 0)),
            ],
            out_specs=pl.BlockSpec((tb, out_features), lambda i: (i, 0)),
        ),
        compiler_params=pltpu.CompilerParams(
            # Independent batch tiles: shard across v7x's 2 TCs; no-op on v5e/v6e.
            dimension_semantics=("parallel",),
        ),
        cost_estimate=cost,
    )(x2d, w2, bias)

    return out2d.reshape(*lead, out_features)


def fourier_features_ref(x, weight):
    f = (2.0 * math.pi) * (x.astype(jnp.float32) @ weight.astype(jnp.float32).T)
    return jnp.concatenate([jnp.cos(f), jnp.sin(f)], axis=-1).astype(x.dtype)


if __name__ == "__main__":
    key = jax.random.PRNGKey(0)
    k_x, k_w = jax.random.split(key)

    B = 8                # batch
    in_features = 4      # e.g. timestep / conditioning feature dim
    out_features = 32    # must be even
    std = 1.0

    # Deterministic "parameter" init, matching torch.randn(out//2, in) * std.
    weight = jax.random.normal(k_w, (out_features // 2, in_features), jnp.float32) * std
    x = jax.random.normal(k_x, (B, in_features), jnp.float32)

    out = fourier_features(x, weight)
    out = jax.block_until_ready(out)

    ref = fourier_features_ref(x, weight)
    assert out.shape == (B, out_features)
    assert jnp.allclose(out, ref, atol=1e-5, rtol=1e-5), "mismatch vs reference"

    print("KERNEL_OK")
</pallas_src>

<mosaic_0001>
module attributes {stable_mosaic.version = 11 : i64} {
  func.func @_fourier_features_kernel(%arg0: i32, %arg1: memref<8x4xf32, #tpu.memory_space<vmem>>, %arg2: memref<4x32xf32, #tpu.memory_space<vmem>>, %arg3: memref<1x32xf32, #tpu.memory_space<vmem>>, %arg4: memref<8x32xf32, #tpu.memory_space<vmem>>) attributes {dimension_semantics = [#tpu.dimension_semantics<parallel>], iteration_bounds = array<i64: 1>, scalar_prefetch = 0 : i64, scratch_operands = 0 : i64, tpu.core_type = #tpu.core_type<tc>, window_params = [{transform_indices = @transform_0, window_bounds = array<i64: 8, 4>}, {pipeline_mode = #tpu.pipeline_mode<synchronous>, transform_indices = @transform_1, window_bounds = array<i64: 4, 32>}, {pipeline_mode = #tpu.pipeline_mode<synchronous>, transform_indices = @transform_2, window_bounds = array<i64: 1, 32>}, {transform_indices = @transform_3, window_bounds = array<i64: 8, 32>}]} {
    %c0 = arith.constant 0 : index
    %c0_0 = arith.constant 0 : index
    %0 = vector.load %arg1[%c0, %c0_0] : memref<8x4xf32, #tpu.memory_space<vmem>>, vector<8x4xf32>
    %c0_1 = arith.constant 0 : index
    %c0_2 = arith.constant 0 : index
    %1 = vector.load %arg2[%c0_1, %c0_2] : memref<4x32xf32, #tpu.memory_space<vmem>>, vector<4x32xf32>
    %cst = arith.constant dense<0.000000e+00> : vector<8x32xf32>
    %2 = tpu.matmul %0, %1, %cst {dimension_numbers = #tpu.dot_dimension_numbers<[1], [0], [0], [1], [0, 0, 1, 1], [], []>} : vector<8x4xf32>, vector<4x32xf32>, vector<8x32xf32> -> vector<8x32xf32>
    %c0_3 = arith.constant 0 : index
    %c0_4 = arith.constant 0 : index
    %3 = vector.load %arg3[%c0_3, %c0_4] : memref<1x32xf32, #tpu.memory_space<vmem>>, vector<1x32xf32>
    %4 = vector.broadcast %3 : vector<1x32xf32> to vector<8x32xf32>
    %5 = arith.addf %2, %4 : vector<8x32xf32>
    %6 = math.cos %5 : vector<8x32xf32>
    %c0_5 = arith.constant 0 : index
    %c0_6 = arith.constant 0 : index
    %7 = vector.load %arg4[%c0_5, %c0_6] : memref<8x32xf32, #tpu.memory_space<vmem>>, vector<8x32xf32>
    tpu.vector_store %arg4[%c0_5, %c0_6], %6 {strides = array<i32>} : memref<8x32xf32, #tpu.memory_space<vmem>>, vector<8x32xf32>,
    return
  }
  func.func @transform_0(%arg0: i32) -> (i32, i32) {
    %c0_i32 = arith.constant 0 : i32
    %c0_i32_0 = arith.constant 0 : i32
    return %arg0, %c0_i32 : i32, i32
  }
  func.func @transform_1(%arg0: i32) -> (i32, i32) {
    %c0_i32 = arith.constant 0 : i32
    %c0_i32_0 = arith.constant 0 : i32
    %c0_i32_1 = arith.constant 0 : i32
    return %c0_i32, %c0_i32_0 : i32, i32
  }
  func.func @transform_2(%arg0: i32) -> (i32, i32) {
    %c0_i32 = arith.constant 0 : i32
    %c0_i32_0 = arith.constant 0 : i32
    %c0_i32_1 = arith.constant 0 : i32
    return %c0_i32, %c0_i32_0 : i32, i32
  }
  func.func @transform_3(%arg0: i32) -> (i32, i32) {
    %c0_i32 = arith.constant 0 : i32
    %c0_i32_0 = arith.constant 0 : i32
    return %arg0, %c0_i32 : i32, i32
  }
}

</mosaic_0001>

<llo_original>
// kernel: tpu_custom_call.1
$region0: #{tpu_custom_call.1}
  #allocation0 [shape = 'u32[]', space=smem, size = 0x4, offset = 0x4, fixed_abs, tag = 'smem constant byte address 0x4 - core index']
  #allocation1 [shape = 'u32[144,128]{1,0:T(1,128)}', space=vmem, size = 0x12000, scoped, tag = 'internal scratch']
  %s0 = inlined_call_operand.vmem [shape: f32[8,4], index: 0, kind: input, shape index: {}]
  %s1 = inlined_call_operand.vmem [shape: f32[4,32], index: 1, kind: input, shape index: {}]
  %s2 = inlined_call_operand.vmem [shape: f32[1,32], index: 2, kind: input, shape index: {}]
  %s3 = inlined_call_operand.hbm [shape: f32[8,32], index: 3, kind: output, shape index: {}]
  %s4 = sld [smem:[#allocation0]]
  $region22: #{tpu_custom_call.1} parent=0
    _
  %s6 = ssub.s32 1, %s4
  %s7 = scalar_select 0, %s6, %s4
  $region1: #{tpu_custom_call.1} parent=0
    #allocation2 [shape = 'u8[4096]{0}', space=vmem, size = 0x1000, scoped, tag = 'output window, operand 0, single buffered']
    #allocation3 [shape = 's32[1]{0}', space=sflag, size = 0x4, scoped, tag = 'scoped memory for tpu_custom_call.1']
    %8 = vsyncpa [#allocation3], 0
    // Predicated region
    $region2: #{tpu_custom_call.1} parent=1 // pred_check
      _
    $region3: #{tpu_custom_call.1} parent=1 // pred_check_branch
      %10 = sbr.rel (0) target = $region5
    $region4: #{tpu_custom_call.1} parent=1 // pred_region
      _
    $region5: #{tpu_custom_call.1} parent=1 // pred_fallthru
      _
    // Predicated region
    $region6: #{tpu_custom_call.1} parent=1 // pred_check
      _
    $region7: #{tpu_custom_call.1} parent=1 // pred_check_branch
      %12 = sbr.rel (0) target = $region9
    $region8: #{tpu_custom_call.1} parent=1 // pred_region
      _
    $region9: #{tpu_custom_call.1} parent=1 // pred_fallthru
      _
    // Predicated region
    $region10: #{tpu_custom_call.1} parent=1 // pred_check
      _
    $region11: #{tpu_custom_call.1} parent=1 // pred_check_branch
      %14 = sbr.rel (0) target = $region13
    $region12: #{tpu_custom_call.1} parent=1 // pred_region
      _
    $region13: #{tpu_custom_call.1} parent=1 // pred_fallthru
      _
    %v15 = vld [vmem:[%s0] sm:$0xff]
    %v16 = vld [vmem:[%s1] sm:$0xf]
    %v17 = vld [vmem:[%s2] sm:$0x1]
    %v19 = vlaneseq
    %v20 = vshrl.u32 %v19, 7
    %v21 = vsub.s32 0, %v20
    %v22 = vrot.slane %v17, %v21
    %vm24 = vcmask 31744
    %v26 = vsel %vm24, %v15, 0
    %vm28 = vcmask 1043456
    %v30 = vsel %vm28, %v16, 0
    %32 = vmatprep.subr.mxu0 0.0
    %33 = vmatpush1.msra.mxu0 0.0
    %34 = vmatprep.subr.mxu0 0.0
    %35 = vmatpush1.msra.mxu0 0.0
    %36 = vmatprep.subr.mxu0 0.0
    %37 = vmatpush1.msra.mxu0 0.0
    %38 = vmatprep.subr.mxu0 0.0
    %39 = vmatpush1.msra.mxu0 0.0
    %40 = vmatprep.subr.mxu0 0.0
    %41 = vmatpush1.msra.mxu0 0.0
    %42 = vmatprep.subr.mxu0 0.0
    %43 = vmatpush1.msra.mxu0 0.0
    %44 = vmatprep.subr.mxu0 0.0
    %45 = vmatpush1.msra.mxu0 0.0
    %46 = vmatprep.subr.mxu0 0.0
    %47 = vmatpush1.msra.mxu0 0.0
    %48 = vmatprep.subr.mxu0 0.0
    %49 = vmatpush1.msra.mxu0 0.0
    %50 = vmatprep.subr.mxu0 0.0
    %51 = vmatpush1.msra.mxu0 0.0
    %52 = vmatprep.subr.mxu0 0.0
    %53 = vmatpush1.msra.mxu0 0.0
    %54 = vmatprep.subr.mxu0 0.0
    %55 = vmatpush1.msra.mxu0 0.0
    %56 = vmatprep.subr.mxu0 0.0
    %57 = vmatpush1.msra.mxu0 0.0
    %58 = vmatprep.subr.mxu0 0.0
    %59 = vmatpush1.msra.mxu0 0.0
    %60 = vmatprep.subr.mxu0 0.0
    %61 = vmatpush1.msra.mxu0 0.0
    %62 = vmatprep.subr.mxu0 0.0
    %63 = vmatpush1.msra.mxu0 %v30
    %64 = vmatprep.subr.mxu0 0.0
    %65 = vmatpush2.msra.mxu0 0.0
    %66 = vmatprep.subr.mxu0 0.0
    %67 = vmatpush2.msra.mxu0 0.0
    %68 = vmatprep.subr.mxu0 0.0
    %69 = vmatpush2.msra.mxu0 0.0
    %70 = vmatprep.subr.mxu0 0.0
    %71 = vmatpush2.msra.mxu0 0.0
    %72 = vmatprep.subr.mxu0 0.0
    %73 = vmatpush2.msra.mxu0 0.0
    %74 = vmatprep.subr.mxu0 0.0
    %75 = vmatpush2.msra.mxu0 0.0
    %76 = vmatprep.subr.mxu0 0.0
    %77 = vmatpush2.msra.mxu0 0.0
    %78 = vmatprep.subr.mxu0 0.0
    %79 = vmatpush2.msra.mxu0 0.0
    %80 = vmatprep.subr.mxu0 0.0
    %81 = vmatpush2.msra.mxu0 0.0
    %82 = vmatprep.subr.mxu0 0.0
    %83 = vmatpush2.msra.mxu0 0.0
    %84 = vmatprep.subr.mxu0 0.0
    %85 = vmatpush2.msra.mxu0 0.0
    %86 = vmatprep.subr.mxu0 0.0
    %87 = vmatpush2.msra.mxu0 0.0
    %88 = vmatprep.subr.mxu0 0.0
    %89 = vmatpush2.msra.mxu0 0.0
    %90 = vmatprep.subr.mxu0 0.0
    %91 = vmatpush2.msra.mxu0 0.0
    %92 = vmatprep.subr.mxu0 0.0
    %93 = vmatpush2.msra.mxu0 0.0
    %94 = vmatprep.subr.mxu0 0.0
    %95 = vmatpush2.msra.mxu0 0.0
    %96 = vmatprep.mubr.f32.mxu0 0.0
    %97 = vmatmul.mubr.f32.gmra.mxu0 %v26
    %v98 = vpop.f32.mrf.mxu0
    %v99 = vadd.f32 %v22, %v98
    %v100 = vpop.f32.mrf.mxu0
    %101 = vdwg.mxu0
    %v102 = vand.u32 2147483647, %v99
    %vm103 = vcmp.le.f32.partialorder %v102, 0.7853982
    %vm104 = vcmp.lt.s32.totalorder %v99, 0
    %v105 = vand.u32 %v99, 2139095040
    %v106 = vshrl.u32 %v105, 23
    %v107 = vsub.s32 %v106, 127
    %v108 = vand.u32 2147483647, %v99
    %v109 = vand.u32 %v108, 8388607
    %v110 = vor.u32 %v109, 8388608
    %v111 = vsub.s32 0, %v110
    %v112 = vadd.s32 %v107, 1
    %vm113 = vcmp.gt.s32.totalorder %v112, 0
    %v114 = vsel %vm113, %v112, 0
    %v115 = vshrl.u32 %v114, 5
    %v116 = vand.u32 %v114, 31
    %v117 = vsub.s32 32, %v116
    %v118 = vshrl.u32 683565275, %v117
    %v119 = vshll.u32 683565275, %v116
    %v120 = vshrl.u32 2475754826, %v117
    %v121 = vor.u32 %v119, %v120
    %v122 = vshll.u32 2475754826, %v116
    %v123 = vshrl.u32 2131351028, %v117
    %v124 = vor.u32 %v122, %v123
    %v125 = vshll.u32 2131351028, %v116
    %v126 = vshrl.u32 2102212464, %v117
    %v127 = vor.u32 %v125, %v126
    %v128 = vshll.u32 2102212464, %v116
    %v129 = vshrl.u32 920167782, %v117
    %v130 = vor.u32 %v128, %v129
    %v131 = vshll.u32 920167782, %v116
    %v132 = vshrl.u32 1326507024, %v117
    %v133 = vor.u32 %v131, %v132
    %vm134 = vcmp.lt.s32.totalorder %v115, 1
    %vm135 = vcmp.lt.s32.totalorder %v115, 2
    %vm136 = vcmp.lt.s32.totalorder %v115, 3
    %vm137 = vcmp.lt.s32.totalorder %v115, 4
    %v138 = vsel %vm134, %v118, %v121
    %v139 = vsel %vm137, %v127, 2102212464
    %v140 = vsel %vm136, %v124, %v139
    %v141 = vsel %vm135, %v138, %v140
    %v142 = vsel %vm134, %v121, %v124
    %v143 = vsel %vm137, %v130, 920167782
    %v144 = vsel %vm136, %v127, %v143
    %v145 = vsel %vm135, %v142, %v144
    %v146 = vsel %vm134, %v124, %v127
    %v147 = vsel %vm137, %v133, 1326507024
    %v148 = vsel %vm136, %v130, %v147
    %v149 = vsel %vm135, %v146, %v148
    %v150 = vshll.u32 %v110, 8
    %v151 = vmul.u32.u64.compose %v150, %v149
    %v152 = vextract.low.u32 %v151
    %v153 = vextract.high.u32 %v151
    %v154 = vmul.u32.u64.compose %v150, %v145
    %v155 = vextract.low.u32 %v154
    %v156 = vextract.high.u32 %v154
    %v157 = vmul.u32 %v150, %v141
    %v158 = vadd.s32 %v153, %v155
    %vm159 = vc.u32 %v153, %v155
    %v160 = vadd.s32 %v156, 1
    %v161 = vsel %vm159, %v160, %v156
    %v162 = vadd.s32 %v157, %v161
    %v163 = vadd.s32 %v162, 536870912
    %v164 = vshrl.u32 %v163, 30
    %v165 = vshll.u32 %v164, 30
    %v166 = vsub.s32 %v162, %v165
    %vm167 = vcmp.lt.s32.totalorder %v166, 0
    %v168 = vsub.s32 0, %v166
    %v169 = vsel %vm167, %v168, %v166
    %v170 = vclz %v169
    %v171 = vsub.s32 %v170, 2
    %vm172 = vcmp.gt.s32.totalorder 0, %v171
    %v173 = vsel %vm172, 0, %v171
    %v174 = vsub.s32 32, %v173
    %v175 = vshll.u32 %v166, %v173
    %v176 = vshrl.u32 %v158, %v174
    %v177 = vor.u32 %v175, %v176
    %v178 = vsub.s32 4294967266, %v173
    %v179 = vadd.s32 %v178, 127
    %v180 = vshll.u32 %v179, 23
    %v181 = vor.u32 4788187, %v180
    %v182 = vand.u32 2147483647, %v181
    %v184 = vcvt.s32.f32 %v177
    %v185 = vmul.f32 %v184, %v182
    %v186 = vxor.u32 %v185, 2147483648
    %v187 = vsel %vm104, %v186, %v185
    %v188 = vsub.s32 4, %v164
    %v189 = vsel %vm104, %v188, %v164
    %v190 = vsel %vm103, %v99, %v187
    %v191 = vsel %vm103, 0, %v189
    %v192 = vcosq.f32.pop %v190
    %v193 = vsinq.f32.pop %v190
    %vm194 = vweird.f32 %v99
    %v195 = vand.u32 %v191, 3
    %vm196 = vcmp.lt.s32.totalorder %v195, 2
    %vm197 = vcmp.eq.s32.totalorder %v195, 0
    %v198 = vxor.u32 %v193, 2147483648
    %v199 = vsel %vm197, %v192, %v198
    %vm200 = vcmp.eq.s32.totalorder %v195, 2
    %v201 = vxor.u32 %v192, 2147483648
    %v202 = vsel %vm200, %v201, %v193
    %v203 = vsel %vm196, %v199, %v202
    %v204 = vsel %vm194, nan, %v203
    %vm205 = vcmask 261120
    %206 = vst.msk [vmem:[#allocation2] sm:$0xff] %vm205, %v204
    // Predicated region
    $region14: #{tpu_custom_call.1} parent=1 // pred_check
      _
    $region15: #{tpu_custom_call.1} parent=1 // pred_check_branch
      %208 = sbr.rel (0) target = $region17
    $region16: #{tpu_custom_call.1} parent=1 // pred_region
      %s210 = ssub.s32 128, 128
      %211 = vsyncadd [#allocation3], %s210
      %s213 = sshll.u32 [#allocation2], 4
      %s214 = int_to_ptr.vmem [resolvable:$true] %s213
      %216 = dma.vmem_to_hbm [thread:$0]  %s214, 128, %s3, [#allocation3]
    $region17: #{tpu_custom_call.1} parent=1 // pred_fallthru
      _
    // Predicated region
    $region18: #{tpu_custom_call.1} parent=1 // pred_check
      _
    $region19: #{tpu_custom_call.1} parent=1 // pred_check_branch
      %218 = sbr.rel (0) target = $region21
    $region20: #{tpu_custom_call.1} parent=1 // pred_region
      %219 = dma.done [#allocation3], 128
    $region21: #{tpu_custom_call.1} parent=1 // pred_fallthru
      _
    %220 = vsyncpa [#allocation3], 1

</llo_original>
